<compile_context>
chip_gen: v7x
topology: tpu7x:2x2x1
jax: 0.10.0
libtpu: 0.0.40
codegen_flags: <defaults>
</compile_context>

<pallas_src>
import functools

import jax
import jax.numpy as jnp
from jax.experimental import pallas as pl
from jax.experimental.pallas import tpu as pltpu

_LANES = 128
_SUBLANES = 8
_CHUNK_ROWS = 1024                    # compute-chunk rows (bounds f32 intermediates)
_TARGET_BLOCK_BYTES = 4 * 1024 * 1024  # per-input DMA block target (native dtype)
_VMEM_LIMIT_BYTES = 32 * 1024 * 1024   # 2 inputs x 2 bufs x 4 MiB + compute headroom


@functools.lru_cache(maxsize=None)
def _num_tensorcores() -> int:
    """Best-effort TensorCore count for the local chip (1 on failure)."""
    try:
        info = pltpu.get_tpu_info()
        for name in ("num_cores", "num_tensorcores", "core_count",
                     "num_cores_per_chip", "cores_per_chip"):
            v = getattr(info, name, None)
            if v is not None:
                try:
                    v = int(v)
                except Exception:
                    continue
                if v > 0:
                    return v
    except Exception:
        pass
    try:
        v = getattr(jax.devices()[0], "num_cores", None)
        if v is not None and int(v) > 0:
            return int(v)
    except Exception:
        pass
    return 1


def _mse_partial_kernel(x1_ref, x2_ref, out_ref, *, tm, chunk, rows, steps,
                        need_mask):
    c = pl.program_id(0)   # cross-core split ("parallel")
    j = pl.program_id(1)   # reduction over row-blocks ("arbitrary", last axis)

    @pl.when(j == 0)
    def _():
        out_ref[...] = jnp.zeros_like(out_ref)

    g = c * steps + j      # true (unclamped) block index; virtual blocks -> masked
    base = g * tm          # first row covered by this block
    n_chunks = tm // chunk  # python int >= 1

    @pl.loop(0, n_chunks)
    def _(i):
        off = pl.multiple_of(i * chunk, chunk)
        # Cast per chunk (inputs stay in native dtype in HBM/VMEM block).
        a = x1_ref[pl.ds(off, chunk), :].astype(jnp.float32)
        b = x2_ref[pl.ds(off, chunk), :].astype(jnp.float32)
        d = a - b
        sq = d * d

        def accum(vals):
            # vreg-aligned reduction: sum whole (8,128) vregs on the VALU and
            # accumulate into the VMEM-resident (1,8,128) output block.  The
            # single cross-sublane/lane reduce happens once, outside the kernel.
            out_ref[...] += jnp.sum(
                vals.reshape(chunk // _SUBLANES, _SUBLANES, _LANES),
                axis=0).reshape(1, _SUBLANES, _LANES)

        if need_mask:
            chunk_start = base + i * chunk

            @pl.when(chunk_start + chunk > rows)       # ragged tail / virtual block
            def _():
                limit = jnp.clip(rows - chunk_start, 0, chunk)
                r = jax.lax.broadcasted_iota(jnp.int32, sq.shape, 0)
                accum(jnp.where(r < limit, sq, 0.0))

            @pl.when(chunk_start + chunk <= rows)      # fast path: no mask work
            def _():
                accum(sq)
        else:
            accum(sq)


def _mse_mean_impl(x1, x2):
    """Mean squared error over all elements via a Pallas streaming reduction."""
    assert x1.shape == x2.shape, "MSELoss requires matching shapes"
    total = x1.size

    x1f = jnp.ravel(x1)
    x2f = jnp.ravel(x2)

    # Pad to a whole number of (8,128) vregs so the (rows,128) view and the
    # in-kernel (chunk//8, 8, 128) reduction are always aligned.  Padded
    # entries are 0 in both inputs -> contribute 0.
    pad = (-total) % (_SUBLANES * _LANES)
    if pad:
        x1f = jnp.pad(x1f, (0, pad))
        x2f = jnp.pad(x2f, (0, pad))

    rows = x1f.size // _LANES
    x1m = x1f.reshape(rows, _LANES)
    x2m = x2f.reshape(rows, _LANES)

    # Compute-chunk rows (rows is a multiple of 8, so chunk is too).
    chunk = min(_CHUNK_ROWS, rows)

    # Dtype-aware DMA block: ~4 MiB of native dtype per input block, as a
    # multiple of the compute chunk, never exceeding the array extent.
    itemsize = max(jnp.dtype(x1.dtype).itemsize, jnp.dtype(x2.dtype).itemsize)
    target_rows = max(chunk,
                      (_TARGET_BLOCK_BYTES // (_LANES * itemsize)) // chunk * chunk)
    tm = rows if rows <= chunk else min(target_rows, (rows // chunk) * chunk)

    nblocks = pl.cdiv(rows, tm)
    # Split row-blocks across TensorCores only on multi-core chips (v7x);
    # on single-TC v5e/v6e this stays 1 (no clamp re-reads, no extra masking).
    nsplit = 2 if (_num_tensorcores() >= 2 and nblocks >= 2) else 1
    steps = pl.cdiv(nblocks, nsplit)
    need_mask = (nsplit * steps * tm != rows)
    clamp = (nsplit * steps > nblocks)

    def in_map(c, j):
        g = c * steps + j
        if clamp:
            g = jnp.minimum(g, nblocks - 1)   # keep the DMA in bounds; kernel masks it
        return (g, 0)

    kernel = functools.partial(_mse_partial_kernel, tm=tm, chunk=chunk,
                               rows=rows, steps=steps, need_mask=need_mask)

    partials = pl.pallas_call(
        kernel,
        out_shape=jax.ShapeDtypeStruct((nsplit, _SUBLANES, _LANES), jnp.float32),
        grid_spec=pltpu.PrefetchScalarGridSpec(
            num_scalar_prefetch=0,
            grid=(nsplit, steps),
            in_specs=[
                pl.BlockSpec((tm, _LANES), in_map),
                pl.BlockSpec((tm, _LANES), in_map),
            ],
            out_specs=pl.BlockSpec((1, _SUBLANES, _LANES), lambda c, j: (c, 0, 0)),
        ),
        compiler_params=pltpu.CompilerParams(
            dimension_semantics=("parallel", "arbitrary"),
            vmem_limit_bytes=_VMEM_LIMIT_BYTES,
        ),
    )(x1m, x2m)

    return jnp.sum(partials) / jnp.float32(total)


@jax.custom_vjp
def _mse_mean(x1, x2):
    return _mse_mean_impl(x1, x2)


def _mse_mean_fwd(x1, x2):
    return _mse_mean_impl(x1, x2), (x1, x2)


def _mse_mean_bwd(res, g):
    # TODO(synk): for the training path at scale, fuse this into a second
    # streaming Pallas kernel (read x1/x2 once, write dx1 — and skip dx2 when
    # the target carries no gradient); the backward moves ~2x the forward's
    # HBM bytes and dominates end-to-end training time.
    x1, x2 = res
    n = x1.size
    scale = g.astype(jnp.float32) * (2.0 / n)
    d = (x1.astype(jnp.float32) - x2.astype(jnp.float32)) * scale
    return d.astype(x1.dtype), (-d).astype(x2.dtype)


_mse_mean.defvjp(_mse_mean_fwd, _mse_mean_bwd)

_mse_mean_jit = jax.jit(_mse_mean)


class MSELossHeadPallas:
    """JAX/Pallas re-implementation of MSELossHead (parameter-free)."""

    def __init__(self):
        self.reduce = False
        self.training = True

    def report(self, gold_file=None):
        return ""

    def _estimate_loss(self, logits, x2, *args, **kwargs):
        loss = _mse_mean_jit(logits, x2)
        ntoken = x2.shape[0]
        # PyTorch: loss.detach() * x2.shape[0] (then .item()).  Kept as a JAX
        # scalar so this is also safe under jit/grad tracing.
        losses = jax.lax.stop_gradient(loss) * ntoken
        return loss, (ntoken, losses)

    def infer(self, x1, x2, *args, **kwargs):
        return self._estimate_loss(x1, x2, *args, **kwargs)

    def __call__(self, x1, x2, *args, negative=None, **kwargs):
        if not self.training:
            loss, (ntoken, losses) = self.infer(x1, x2, *args, **kwargs)
            extra = {"nsample": ntoken, "main_loss": losses}
            return loss, (ntoken, extra)
        loss, (ntoken, losses) = self._estimate_loss(x1, x2, *args, **kwargs)
        extra = {"nsample": ntoken, "main_loss": losses}
        return loss, (ntoken, extra)


if __name__ == "__main__":
    key = jax.random.PRNGKey(0)
    k1, k2, k3, k4, k5, k6 = jax.random.split(key, 6)

    head = MSELossHeadPallas()

    # Small NCHW-like tensors (batch=2, channels=4, spatial=16x16): single block.
    x1 = jax.random.normal(k1, (2, 4, 16, 16), dtype=jnp.float32)
    x2 = jax.random.normal(k2, (2, 4, 16, 16), dtype=jnp.float32)
    loss, (ntoken, extra) = head(x1, x2)
    loss = jax.block_until_ready(loss)
    ref = jnp.mean((x1 - x2) ** 2)
    assert abs(float(loss) - float(ref)) < 1e-5, (float(loss), float(ref))
    assert ntoken == x2.shape[0]
    assert "nsample" in extra and "main_loss" in extra

    # Ragged f32 case: exercises the chunked loop, the partial last block and
    # (on multi-core chips) the cross-core split with the pl.when mask path.
    y1 = jax.random.normal(k3, (4, 8, 130, 128), dtype=jnp.float32)
    y2 = jax.random.normal(k4, (4, 8, 130, 128), dtype=jnp.float32)
    loss2, _ = head(y1, y2)
    loss2 = jax.block_until_ready(loss2)
    ref2 = jnp.mean((y1 - y2) ** 2)
    assert abs(float(loss2) - float(ref2)) < 1e-4 * max(1.0, abs(float(ref2))), (
        float(loss2), float(ref2))

    # bf16 case with a non-vreg-multiple element count: exercises the
    # dtype-aware block sizing and the wrapper-side zero padding.
    z1 = jax.random.normal(k5, (2, 3, 100, 64), dtype=jnp.bfloat16)
    z2 = jax.random.normal(k6, (2, 3, 100, 64), dtype=jnp.bfloat16)
    loss3, _ = head(z1, z2)
    loss3 = jax.block_until_ready(loss3)
    ref3 = jnp.mean((z1.astype(jnp.float32) - z2.astype(jnp.float32)) ** 2)
    assert abs(float(loss3) - float(ref3)) < 1e-4 * max(1.0, abs(float(ref3))), (
        float(loss3), float(ref3))

    # Backward via custom_vjp: d/dx1 = 2*(x1-x2)/N.
    g1 = jax.grad(lambda a, b: head(a, b)[0], argnums=0)(x1, x2)
    g1 = jax.block_until_ready(g1)
    gref = 2.0 * (x1 - x2) / x1.size
    assert float(jnp.max(jnp.abs(g1 - gref))) < 1e-6

    print("KERNEL_OK")
</pallas_src>

<mosaic_0001>
module attributes {stable_mosaic.version = 11 : i64} {
  func.func @_mse_partial_kernel(%arg0: i32, %arg1: i32, %arg2: memref<16x128xf32, #tpu.memory_space<vmem>>, %arg3: memref<16x128xf32, #tpu.memory_space<vmem>>, %arg4: memref<1x8x128xf32, #tpu.memory_space<vmem>>) attributes {dimension_semantics = [#tpu.dimension_semantics<parallel>, #tpu.dimension_semantics<arbitrary>], iteration_bounds = array<i64: 1, 1>, scalar_prefetch = 0 : i64, scratch_operands = 0 : i64, tpu.core_type = #tpu.core_type<tc>, window_params = [{transform_indices = @transform_0, window_bounds = array<i64: 16, 128>}, {transform_indices = @transform_1, window_bounds = array<i64: 16, 128>}, {transform_indices = @transform_2, window_bounds = array<i64: 1, 8, 128>}]} {
    %c0_i32 = arith.constant 0 : i32
    %0 = arith.cmpi eq, %arg1, %c0_i32 : i32
    %1 = arith.extui %0 : i1 to i32
    %c0_i32_0 = arith.constant 0 : i32
    %2 = arith.cmpi ne, %1, %c0_i32_0 : i32
    scf.if %2 {
      %cst_11 = arith.constant 0.000000e+00 : f32
      %19 = vector.broadcast %cst_11 : f32 to vector<1x8x128xf32>
      %c0_12 = arith.constant 0 : index
      %c0_13 = arith.constant 0 : index
      %c0_14 = arith.constant 0 : index
      %20 = vector.load %arg4[%c0_12, %c0_13, %c0_14] : memref<1x8x128xf32, #tpu.memory_space<vmem>>, vector<1x8x128xf32>
      tpu.vector_store %arg4[%c0_12, %c0_13, %c0_14], %19 {strides = array<i32>} : memref<1x8x128xf32, #tpu.memory_space<vmem>>, vector<1x8x128xf32>,
    } else {
    }
    %c0_i32_1 = arith.constant 0 : i32
    %c1_i32 = arith.constant 1 : i32
    %3 = arith.muli %c0_i32_1, %c1_i32 : i32
    %c0_i32_2 = arith.constant 0 : i32
    %4 = arith.addi %c0_i32_2, %3 : i32
    %c16_i32 = arith.constant 16 : i32
    %5 = arith.muli %4, %c16_i32 : i32
    %6 = tpu.assume_multiple %5, 16 : i32
    %7 = arith.index_cast %6 : i32 to index
    %c0 = arith.constant 0 : index
    %8 = vector.load %arg2[%7, %c0] : memref<16x128xf32, #tpu.memory_space<vmem>>, vector<16x128xf32>
    %9 = arith.index_cast %6 : i32 to index
    %c0_3 = arith.constant 0 : index
    %10 = vector.load %arg3[%9, %c0_3] : memref<16x128xf32, #tpu.memory_space<vmem>>, vector<16x128xf32>
    %11 = arith.subf %8, %10 : vector<16x128xf32>
    %12 = arith.mulf %11, %11 : vector<16x128xf32>
    %c0_4 = arith.constant 0 : index
    %c0_5 = arith.constant 0 : index
    %c0_6 = arith.constant 0 : index
    %13 = vector.load %arg4[%c0_4, %c0_5, %c0_6] : memref<1x8x128xf32, #tpu.memory_space<vmem>>, vector<1x8x128xf32>
    %14 = vector.shape_cast %12 : vector<16x128xf32> to vector<2x8x128xf32>
    %cst = arith.constant dense<0.000000e+00> : vector<8x128xf32>
    %15 = vector.multi_reduction <add>, %14, %cst [0] : vector<2x8x128xf32> to vector<8x128xf32>
    %16 = vector.shape_cast %15 : vector<8x128xf32> to vector<1x8x128xf32>
    %17 = arith.addf %13, %16 : vector<1x8x128xf32>
    %c0_7 = arith.constant 0 : index
    %c0_8 = arith.constant 0 : index
    %c0_9 = arith.constant 0 : index
    %18 = vector.load %arg4[%c0_7, %c0_8, %c0_9] : memref<1x8x128xf32, #tpu.memory_space<vmem>>, vector<1x8x128xf32>
    tpu.vector_store %arg4[%c0_7, %c0_8, %c0_9], %17 {strides = array<i32>} : memref<1x8x128xf32, #tpu.memory_space<vmem>>, vector<1x8x128xf32>,
    %c1_i32_10 = arith.constant 1 : i32
    return
  }
  func.func @transform_0(%arg0: i32, %arg1: i32) -> (i32, i32) {
    %c1_i32 = arith.constant 1 : i32
    %0 = arith.muli %arg0, %c1_i32 : i32
    %1 = arith.addi %0, %arg1 : i32
    %c0_i32 = arith.constant 0 : i32
    %c0_i32_0 = arith.constant 0 : i32
    return %1, %c0_i32 : i32, i32
  }
  func.func @transform_1(%arg0: i32, %arg1: i32) -> (i32, i32) {
    %c1_i32 = arith.constant 1 : i32
    %0 = arith.muli %arg0, %c1_i32 : i32
    %1 = arith.addi %0, %arg1 : i32
    %c0_i32 = arith.constant 0 : i32
    %c0_i32_0 = arith.constant 0 : i32
    return %1, %c0_i32 : i32, i32
  }
  func.func @transform_2(%arg0: i32, %arg1: i32) -> (i32, i32, i32) {
    %c0_i32 = arith.constant 0 : i32
    %c0_i32_0 = arith.constant 0 : i32
    %c0_i32_1 = arith.constant 0 : i32
    return %arg0, %c0_i32, %c0_i32_0 : i32, i32, i32
  }
}

</mosaic_0001>

<llo_original>
// kernel: _mse_mean.1
$region0: #{_mse_mean.1}
  #allocation0 [shape = 'u32[]', space=smem, size = 0x4, offset = 0x4, fixed_abs, tag = 'smem constant byte address 0x4 - core index']
  #allocation1 [shape = 'u32[144,128]{1,0:T(1,128)}', space=vmem, size = 0x12000, scoped, tag = 'internal scratch']
  %s0 = inlined_call_operand.vmem [shape: f32[16,128], index: 0, kind: input, shape index: {}]
  %s1 = inlined_call_operand.vmem [shape: f32[16,128], index: 1, kind: input, shape index: {}]
  %s2 = inlined_call_operand.vmem [shape: f32[1,8,128], index: 2, kind: output, shape index: {}]
  %s3 = sld [smem:[#allocation0]]
  $region22: #{_mse_mean.1} parent=0
    _
  %s5 = ssub.s32 1, %s3
  %s6 = scalar_select 0, %s5, %s3
  // Predicated region
  $region2: #{_mse_mean.1} parent=0 // pred_check
    _
  $region3: #{_mse_mean.1} parent=0 // pred_check_branch
    %8 = sbr.rel (0) target = $region5
  $region4: #{_mse_mean.1} parent=0 // pred_region
    %s9 = sadd.s32 0, 0
    %s10 = smul.u32 2, %s9
    %p11 = scmp.lt.s32.totalorder %s10, 1
    %s12 = scalar_select %p11, %s10, 1
    %s13 = smul.addr %s12, 8
    %s14 = scalar_lea.vmem %s0, %s13
    %s15 = sadd.s32 0, 0
    %s16 = smul.u32 2, %s15
  $region5: #{_mse_mean.1} parent=0 // pred_fallthru
    _
  // Predicated region
  $region6: #{_mse_mean.1} parent=0 // pred_check
    _
  $region7: #{_mse_mean.1} parent=0 // pred_check_branch
    %18 = sbr.rel (0) target = $region9
  $region8: #{_mse_mean.1} parent=0 // pred_region
    %s19 = sadd.s32 0, 0
    %s20 = smul.u32 2, %s19
    %p21 = scmp.lt.s32.totalorder %s20, 1
    %s22 = scalar_select %p21, %s20, 1
    %s23 = smul.addr %s22, 8
    %s24 = scalar_lea.vmem %s1, %s23
    %s25 = sadd.s32 0, 0
    %s26 = smul.u32 2, %s25
  $region9: #{_mse_mean.1} parent=0 // pred_fallthru
    _
  %s27 = sadd.s32 0, 0
  %s28 = smul.u32 2, %s27
  %p29 = scmp.lt.s32.totalorder %s28, 1
  %s30 = scalar_select %p29, %s28, 1
  %s31 = smul.addr %s30, 8
  %s32 = scalar_lea.vmem %s0, %s31
  %s33 = sadd.s32 0, 0
  %s34 = smul.u32 2, %s33
  %p35 = scmp.lt.s32.totalorder %s34, 1
  %s36 = scalar_select %p35, %s34, 1
  %s37 = smul.addr %s36, 8
  %s38 = scalar_lea.vmem %s1, %s37
  %s39 = sadd.s32 0, 0
  %s40 = smul.u32 2, %s39
  %p41 = scmp.lt.s32.totalorder %s40, 1
  %s42 = scalar_select %p41, %s40, 1
  %s43 = smul.addr %s42, 8
  %s44 = scalar_lea.vmem %s0, %s43
  %s45 = sadd.s32 0, 0
  %s46 = smul.u32 2, %s45
  %s47 = sadd.s32 0, 0
  %s48 = smul.u32 2, %s47
  %p49 = scmp.lt.s32.totalorder %s48, 1
  %s50 = scalar_select %p49, %s48, 1
  %s51 = smul.addr %s50, 8
  %s52 = scalar_lea.vmem %s1, %s51
  %s53 = sadd.s32 0, 0
  %s54 = smul.u32 2, %s53
  %p55 = scmp.eq.s32.totalorder 0, 0
  // Predicated region
  $region10: #{_mse_mean.1} parent=0 // pred_check
    %p56 = pneg %p55
  $region11: #{_mse_mean.1} parent=0 // pred_check_branch
    %58 = sbr.rel (%p56) target = $region13
  $region12: #{_mse_mean.1} parent=0 // pred_region
    %59 = vst [vmem:[%s2] sm:$0xff] 0.0
  $region13: #{_mse_mean.1} parent=0 // pred_fallthru
    _
  %v60 = vld [vmem:[%s44] sm:$0xff]
  %v61 = vld [vmem:[%s44 + $0x8] sm:$0xff]
  %v62 = vld [vmem:[%s52] sm:$0xff]
  %v63 = vld [vmem:[%s52 + $0x8] sm:$0xff]
  %v64 = vsub.f32 %v60, %v62
  %v65 = vsub.f32 %v61, %v63
  %v66 = vmul.f32 %v64, %v64
  %v67 = vmul.f32 %v65, %v65
  %v68 = vld [vmem:[%s2] sm:$0xff]
  %v69 = vadd.f32 %v66, %v67
  %v70 = vadd.f32 %v68, %v69
  %71 = vst [vmem:[%s2] sm:$0xff] %v70
  // Predicated region
  $region14: #{_mse_mean.1} parent=0 // pred_check
    _
  $region15: #{_mse_mean.1} parent=0 // pred_check_branch
    %73 = sbr.rel (0) target = $region17
  $region16: #{_mse_mean.1} parent=0 // pred_region
    _
  $region17: #{_mse_mean.1} parent=0 // pred_fallthru
    _
  // Predicated region
  $region18: #{_mse_mean.1} parent=0 // pred_check
    _
  $region19: #{_mse_mean.1} parent=0 // pred_check_branch
    %75 = sbr.rel (0) target = $region21
  $region20: #{_mse_mean.1} parent=0 // pred_region
    _
  $region21: #{_mse_mean.1} parent=0 // pred_fallthru
    _

</llo_original>
